<compile_context>
chip_gen: v5e
topology: v5e:2x2
jax: 0.10.0
libtpu: 0.0.40
codegen_flags: <defaults>
</compile_context>

<pallas_src>
import jax
import jax.numpy as jnp
from jax import lax
from jax.experimental import pallas as pl
from jax.experimental.pallas import tpu as pltpu

INPUT_DIM = 16            # input_dim of SimpleNN
H1, H2, H3 = 64, 32, 1

LANE = 128                 # row granularity: tiles are multiples of 128 rows
DEFAULT_BATCH_TILE = 8192  # rows per grid step (sweep 8K-32K; see VMEM note)
MIN_TILES = 8              # keep >= 4 grid steps per v7x TensorCore


def _round_up(x, m):
    return (x + m - 1) // m * m


def mlp_kernel(x_ref, w1_ref, b1_ref, w2_ref, b2_ref, w3_ref, b3_ref, o_ref):
    # x tile: (T, 16) in the caller's dtype; cast to bf16 in VMEM (free VPU op).
    x = x_ref[...].astype(jnp.bfloat16)                           # (T, 16)

    # fc1 + ReLU, batch-in-lanes: h1t[f, t] = sum_k W1[f, k] * x[t, k]
    # (q @ k.T-style contraction on the MXU; Mosaic handles the transposed rhs
    # internally, so x is never transposed in HBM).
    h1t = lax.dot_general(
        w1_ref[...], x, (((1,), (1,)), ((), ())),
        preferred_element_type=jnp.float32) + b1_ref[...]          # (64, T) f32
    h1t = jnp.maximum(h1t, 0.0)

    # fc2 + ReLU: standard (32, 64) @ (64, T) MXU matmul, f32 accumulation.
    h2t = jnp.dot(w2_ref[...], h1t.astype(jnp.bfloat16),
                  preferred_element_type=jnp.float32) + b2_ref[...]  # (32, T)
    h2t = jnp.maximum(h2t, 0.0)

    # fc3 (single output unit): VPU multiply against the (32, 1) weight column
    # + sublane (XLU) reduce -> already lane-dense (1, T). No (T, 1) tail.
    z = jnp.sum(h2t * w3_ref[...], axis=0, keepdims=True) + b3_ref[...]  # (1, T)

    # Sigmoid: exp + approximate reciprocal, both EUP-slot ops on only T/128
    # vregs; the store is an unmasked lane-dense vst.
    o_ref[...] = pl.reciprocal(1.0 + jnp.exp(-z), approx=True).astype(o_ref.dtype)


def simple_nn_forward(x, params, *, batch_tile=DEFAULT_BATCH_TILE):
    w1, b1, w2, b2, w3, b3 = params
    B, D = x.shape
    assert D == INPUT_DIM

    # Tile selection: multiples of 128 rows (lane-dense output blocks), at
    # least MIN_TILES grid steps for megacore, capped at batch_tile.
    # VMEM per step ~= tile * 1.8 KiB (lane-padded x double-buffer + f32/bf16
    # intermediates): 8192 -> ~13 MiB, 16384 -> ~26 MiB (v7x-safe with the
    # 48 MiB limit below); go larger only on v5e/v6e by raising the limit.
    b_aligned = _round_up(B, LANE)
    tile = _round_up(pl.cdiv(b_aligned, MIN_TILES), LANE)
    tile = max(LANE, min(batch_tile, tile))
    Bp = _round_up(B, tile)
    if Bp != B:
        x = jnp.pad(x, ((0, Bp - B), (0, 0)))
    grid = (Bp // tile,)

    # Weights / biases are tiny (<20 KiB total): full block, constant
    # index_map (no re-DMA across grid steps).
    full = lambda a: pl.BlockSpec(a.shape, lambda i: (0,) * a.ndim)

    out = pl.pallas_call(
        mlp_kernel,
        out_shape=jax.ShapeDtypeStruct((1, Bp), jnp.float32),
        grid_spec=pltpu.PrefetchScalarGridSpec(
            num_scalar_prefetch=0,
            grid=grid,
            in_specs=[
                pl.BlockSpec((tile, D), lambda i: (i, 0)),   # x tile (caller dtype)
                full(w1), full(b1),
                full(w2), full(b2),
                full(w3), full(b3),
            ],
            out_specs=pl.BlockSpec((1, tile), lambda i: (0, i)),  # lane-dense
        ),
        compiler_params=pltpu.CompilerParams(
            dimension_semantics=("parallel",),
            vmem_limit_bytes=48 * 1024 * 1024,
        ),
    )(x, w1, b1, w2, b2, w3, b3)

    # (1, Bp) -> (Bp, 1) keeps the flat element order: a free reshape.
    return out.reshape(Bp, 1)[:B]


def init_params(key):
    """nn.Linear-style init U(-1/sqrt(in), 1/sqrt(in)), PyTorch (out, in) layout."""
    def linear(key, d_in, d_out):
        kw, kb = jax.random.split(key)
        bound = 1.0 / jnp.sqrt(d_in)
        w = jax.random.uniform(kw, (d_out, d_in), jnp.float32, -bound, bound)
        b = jax.random.uniform(kb, (d_out, 1), jnp.float32, -bound, bound)
        return w, b

    k1, k2, k3 = jax.random.split(key, 3)
    w1, b1 = linear(k1, INPUT_DIM, H1)
    w2, b2 = linear(k2, H1, H2)
    w3, b3 = linear(k3, H2, H3)
    # Matmul weights in bf16 (MXU inputs); biases f32; fc3 weight is a (32, 1)
    # f32 column used on the VPU; fc3 bias is (1, 1) f32.
    return (w1.astype(jnp.bfloat16), b1,
            w2.astype(jnp.bfloat16), b2,
            w3.reshape(H2, 1), b3.reshape(1, 1))


def reference_forward(x, params):
    """Pure-JAX reference mirroring the kernel math (bf16 matmuls, f32 accum)."""
    w1, b1, w2, b2, w3, b3 = params
    xb = x.astype(jnp.bfloat16)
    h1 = jnp.maximum(
        jnp.dot(xb, w1.T, preferred_element_type=jnp.float32)
        + b1.reshape(1, -1), 0.0)
    h2 = jnp.maximum(
        jnp.dot(h1.astype(jnp.bfloat16), w2.T, preferred_element_type=jnp.float32)
        + b2.reshape(1, -1), 0.0)
    z = jnp.dot(h2, w3) + b3.reshape(1, -1)
    return jax.nn.sigmoid(z)


if __name__ == "__main__":
    key = jax.random.PRNGKey(0)
    kx, kp = jax.random.split(key)

    batch = 256  # small example batch; wrapper handles any B (pads if needed)
    x = jax.random.normal(kx, (batch, INPUT_DIM), jnp.float32)  # f32 in, cast in-kernel
    params = init_params(kp)

    out = simple_nn_forward(x, params)
    out = jax.block_until_ready(out)

    ref = reference_forward(x, params)
    assert out.shape == (batch, H3)
    assert bool(jnp.all(jnp.isfinite(out)))
    assert jnp.allclose(out, ref, atol=5e-3, rtol=1e-3), \
        float(jnp.max(jnp.abs(out - ref)))

    print("KERNEL_OK")
</pallas_src>

<mosaic_0001>
module attributes {stable_mosaic.version = 11 : i64} {
  func.func @mlp_kernel(%arg0: i32, %arg1: memref<128x16xf32, #tpu.memory_space<vmem>>, %arg2: memref<64x16xbf16, #tpu.memory_space<vmem>>, %arg3: memref<64x1xf32, #tpu.memory_space<vmem>>, %arg4: memref<32x64xbf16, #tpu.memory_space<vmem>>, %arg5: memref<32x1xf32, #tpu.memory_space<vmem>>, %arg6: memref<32x1xf32, #tpu.memory_space<vmem>>, %arg7: memref<1x1xf32, #tpu.memory_space<vmem>>, %arg8: memref<1x128xf32, #tpu.memory_space<vmem>>) attributes {dimension_semantics = [#tpu.dimension_semantics<parallel>], iteration_bounds = array<i64: 2>, scalar_prefetch = 0 : i64, scratch_operands = 0 : i64, tpu.core_type = #tpu.core_type<tc>, window_params = [{transform_indices = @transform_0, window_bounds = array<i64: 128, 16>}, {pipeline_mode = #tpu.pipeline_mode<synchronous>, transform_indices = @transform_1, window_bounds = array<i64: 64, 16>}, {pipeline_mode = #tpu.pipeline_mode<synchronous>, transform_indices = @transform_2, window_bounds = array<i64: 64, 1>}, {pipeline_mode = #tpu.pipeline_mode<synchronous>, transform_indices = @transform_3, window_bounds = array<i64: 32, 64>}, {pipeline_mode = #tpu.pipeline_mode<synchronous>, transform_indices = @transform_4, window_bounds = array<i64: 32, 1>}, {pipeline_mode = #tpu.pipeline_mode<synchronous>, transform_indices = @transform_5, window_bounds = array<i64: 32, 1>}, {pipeline_mode = #tpu.pipeline_mode<synchronous>, transform_indices = @transform_6, window_bounds = array<i64: 1, 1>}, {transform_indices = @transform_7, window_bounds = array<i64: 1, 128>}]} {
    %c0 = arith.constant 0 : index
    %c0_0 = arith.constant 0 : index
    %0 = vector.load %arg1[%c0, %c0_0] : memref<128x16xf32, #tpu.memory_space<vmem>>, vector<128x16xf32>
    %1 = arith.truncf %0 : vector<128x16xf32> to vector<128x16xbf16>
    %c0_1 = arith.constant 0 : index
    %c0_2 = arith.constant 0 : index
    %2 = vector.load %arg2[%c0_1, %c0_2] : memref<64x16xbf16, #tpu.memory_space<vmem>>, vector<64x16xbf16>
    %cst = arith.constant dense<0.000000e+00> : vector<64x128xf32>
    %3 = tpu.matmul %2, %1, %cst {dimension_numbers = #tpu.dot_dimension_numbers<[1], [1], [0], [0], [0, 0, 1, 0], [], []>} : vector<64x16xbf16>, vector<128x16xbf16>, vector<64x128xf32> -> vector<64x128xf32>
    %c0_3 = arith.constant 0 : index
    %c0_4 = arith.constant 0 : index
    %4 = vector.load %arg3[%c0_3, %c0_4] : memref<64x1xf32, #tpu.memory_space<vmem>>, vector<64x1xf32>
    %5 = vector.broadcast %4 : vector<64x1xf32> to vector<64x128xf32>
    %6 = arith.addf %3, %5 : vector<64x128xf32>
    %cst_5 = arith.constant 0.000000e+00 : f32
    %7 = vector.broadcast %cst_5 : f32 to vector<64x128xf32>
    %8 = arith.maximumf %6, %7 : vector<64x128xf32>
    %c0_6 = arith.constant 0 : index
    %c0_7 = arith.constant 0 : index
    %9 = vector.load %arg4[%c0_6, %c0_7] : memref<32x64xbf16, #tpu.memory_space<vmem>>, vector<32x64xbf16>
    %10 = arith.truncf %8 : vector<64x128xf32> to vector<64x128xbf16>
    %cst_8 = arith.constant dense<0.000000e+00> : vector<32x128xf32>
    %11 = tpu.matmul %9, %10, %cst_8 {dimension_numbers = #tpu.dot_dimension_numbers<[1], [0], [0], [1], [0, 0, 1, 1], [], []>} : vector<32x64xbf16>, vector<64x128xbf16>, vector<32x128xf32> -> vector<32x128xf32>
    %c0_9 = arith.constant 0 : index
    %c0_10 = arith.constant 0 : index
    %12 = vector.load %arg5[%c0_9, %c0_10] : memref<32x1xf32, #tpu.memory_space<vmem>>, vector<32x1xf32>
    %13 = vector.broadcast %12 : vector<32x1xf32> to vector<32x128xf32>
    %14 = arith.addf %11, %13 : vector<32x128xf32>
    %cst_11 = arith.constant 0.000000e+00 : f32
    %15 = vector.broadcast %cst_11 : f32 to vector<32x128xf32>
    %16 = arith.maximumf %14, %15 : vector<32x128xf32>
    %c0_12 = arith.constant 0 : index
    %c0_13 = arith.constant 0 : index
    %17 = vector.load %arg6[%c0_12, %c0_13] : memref<32x1xf32, #tpu.memory_space<vmem>>, vector<32x1xf32>
    %18 = vector.broadcast %17 : vector<32x1xf32> to vector<32x128xf32>
    %19 = arith.mulf %16, %18 : vector<32x128xf32>
    %cst_14 = arith.constant dense<0.000000e+00> : vector<128xf32>
    %20 = vector.multi_reduction <add>, %19, %cst_14 [0] : vector<32x128xf32> to vector<128xf32>
    %21 = vector.shape_cast %20 : vector<128xf32> to vector<1x128xf32>
    %c0_15 = arith.constant 0 : index
    %c0_16 = arith.constant 0 : index
    %22 = vector.load %arg7[%c0_15, %c0_16] : memref<1x1xf32, #tpu.memory_space<vmem>>, vector<1x1xf32>
    %23 = vector.broadcast %22 : vector<1x1xf32> to vector<1x128xf32>
    %24 = arith.addf %21, %23 : vector<1x128xf32>
    %cst_17 = arith.constant 0.000000e+00 : f32
    %25 = vector.broadcast %cst_17 : f32 to vector<1x128xf32>
    %26 = arith.subf %25, %24 : vector<1x128xf32>
    %27 = math.exp %26 : vector<1x128xf32>
    %cst_18 = arith.constant 1.000000e+00 : f32
    %28 = vector.broadcast %cst_18 : f32 to vector<1x128xf32>
    %29 = arith.addf %28, %27 : vector<1x128xf32>
    %30 = tpu.reciprocal %29 {approx = true} : vector<1x128xf32> -> vector<1x128xf32>
    %c0_19 = arith.constant 0 : index
    %c0_20 = arith.constant 0 : index
    %31 = vector.load %arg8[%c0_19, %c0_20] : memref<1x128xf32, #tpu.memory_space<vmem>>, vector<1x128xf32>
    tpu.vector_store %arg8[%c0_19, %c0_20], %30 {strides = array<i32>} : memref<1x128xf32, #tpu.memory_space<vmem>>, vector<1x128xf32>,
    return
  }
  func.func @transform_0(%arg0: i32) -> (i32, i32) {
    %c0_i32 = arith.constant 0 : i32
    %c0_i32_0 = arith.constant 0 : i32
    return %arg0, %c0_i32 : i32, i32
  }
  func.func @transform_1(%arg0: i32) -> (i32, i32) {
    %c0_i32 = arith.constant 0 : i32
    %c0_i32_0 = arith.constant 0 : i32
    %c0_i32_1 = arith.constant 0 : i32
    return %c0_i32, %c0_i32_0 : i32, i32
  }
  func.func @transform_2(%arg0: i32) -> (i32, i32) {
    %c0_i32 = arith.constant 0 : i32
    %c0_i32_0 = arith.constant 0 : i32
    %c0_i32_1 = arith.constant 0 : i32
    return %c0_i32, %c0_i32_0 : i32, i32
  }
  func.func @transform_3(%arg0: i32) -> (i32, i32) {
    %c0_i32 = arith.constant 0 : i32
    %c0_i32_0 = arith.constant 0 : i32
    %c0_i32_1 = arith.constant 0 : i32
    return %c0_i32, %c0_i32_0 : i32, i32
  }
  func.func @transform_4(%arg0: i32) -> (i32, i32) {
    %c0_i32 = arith.constant 0 : i32
    %c0_i32_0 = arith.constant 0 : i32
    %c0_i32_1 = arith.constant 0 : i32
    return %c0_i32, %c0_i32_0 : i32, i32
  }
  func.func @transform_5(%arg0: i32) -> (i32, i32) {
    %c0_i32 = arith.constant 0 : i32
    %c0_i32_0 = arith.constant 0 : i32
    %c0_i32_1 = arith.constant 0 : i32
    return %c0_i32, %c0_i32_0 : i32, i32
  }
  func.func @transform_6(%arg0: i32) -> (i32, i32) {
    %c0_i32 = arith.constant 0 : i32
    %c0_i32_0 = arith.constant 0 : i32
    %c0_i32_1 = arith.constant 0 : i32
    return %c0_i32, %c0_i32_0 : i32, i32
  }
  func.func @transform_7(%arg0: i32) -> (i32, i32) {
    %c0_i32 = arith.constant 0 : i32
    %c0_i32_0 = arith.constant 0 : i32
    return %c0_i32, %arg0 : i32, i32
  }
}

</mosaic_0001>

<llo_original>
// kernel: tpu_custom_call.1
$region0: #{tpu_custom_call.1}
  #allocation0 [shape = 'u32[]', space=smem, size = 0x4, offset = 0x4, fixed_abs, tag = 'smem constant byte address 0x4 - core index']
  #allocation1 [shape = 'u32[72,128]{1,0:T(1,128)}', space=vmem, size = 0x9000, scoped, tag = 'internal scratch']
  #allocation2 [shape = 'f32[1,1]{1,0:T(1,128)S(1)}', space=vmem, size = 0x200, scoped, tag = 'scoped memory for tpu_custom_call.1']
  %s0 = inlined_call_operand.vmem [shape: f32[256,16], index: 0, kind: input, shape index: {}]
  %s1 = inlined_call_operand.vmem [shape: bf16[64,16], index: 1, kind: input, shape index: {}]
  %s2 = inlined_call_operand.vmem [shape: f32[64,1], index: 2, kind: input, shape index: {}]
  %s3 = inlined_call_operand.vmem [shape: bf16[32,64], index: 3, kind: input, shape index: {}]
  %s4 = inlined_call_operand.vmem [shape: f32[32,1], index: 4, kind: input, shape index: {}]
  %s5 = inlined_call_operand.vmem [shape: f32[32,1], index: 5, kind: input, shape index: {}]
  %s6 = inlined_call_operand.<no memory space> [shape: f32[1,1], index: 6, kind: input, shape index: {}]
  %s7 = inlined_call_operand.hbm [shape: f32[1,256], index: 7, kind: output, shape index: {}]
  %s8 = sld [smem:[#allocation0]]
  $region61: #{tpu_custom_call.1} parent=0
    _
  %s10 = ssub.s32 1, %s8
  %s11 = scalar_select 0, %s10, %s8
  %v12 = vstv %s6
  %13 = vst [vmem:[#allocation2] sm:$0x1] %v12
  $region1: #{tpu_custom_call.1} parent=0
    #allocation3 [shape = 'u8[1024]{0}', space=vmem, size = 0x400, scoped, tag = 'output window, operand 0']
    #allocation4 [shape = 's32[2]{0}', space=sflag, size = 0x8, scoped, tag = 'scoped memory for tpu_custom_call.1']
    %14 = vsyncpa [#allocation4], 0
    %s15 = scalar_lea.sflag [#allocation4], 1
    %16 = vsyncpa %s15, 0
    loop: start=0, step=1, limit=4
    $region2: #{tpu_custom_call.1} parent=1 // loop_pre_header
      _
    $region3: #{tpu_custom_call.1} parent=1 // loop_header
      %s18 = sphi 0, %s22
      %p19 = scmp.ge.s32.totalorder %s18, 4
      %s28 = sphi 0, %s30
      %s31 = sphi 0, %s28
      %s32 = sphi 0, %s31
      %s48 = sphi 0, %s32
      %s52 = sphi 0, %s52
      %s54 = sphi 0, %s52
      %s55 = sphi 0, %s54
      %s69 = sphi 0, %s55
      %s73 = sphi 0, %s73
      %s75 = sphi 0, %s73
      %s76 = sphi 0, %s75
      %s90 = sphi 0, %s76
      %s94 = sphi 0, %s94
      %s96 = sphi 0, %s94
      %s97 = sphi 0, %s96
      %s111 = sphi 0, %s97
      %s115 = sphi 0, %s115
      %s117 = sphi 0, %s115
      %s118 = sphi 0, %s117
      %s132 = sphi 0, %s118
      %s136 = sphi 0, %s136
      %s138 = sphi 0, %s136
      %s139 = sphi 0, %s138
      %s153 = sphi 0, %s139
      %s157 = sphi 0, %s157
      %s159 = sphi 0, %s157
      %s160 = sphi 0, %s159
      %s174 = sphi 0, %s160
      %s180 = sphi 0, %s182
      %s183 = sphi 0, %s180
      %s184 = sphi 0, %s183
      %s200 = sphi 0, %s184
    $region4: #{tpu_custom_call.1} parent=1 // loop_header_branch
      %21 = sbr.rel (%p19) target = $region8
    $region5: #{tpu_custom_call.1} parent=1 // loop_body
      %s23 = ssub.s32 %s18, 1
      %s24 = ssub.s32 %s18, 2
      %s25 = sadd.s32 %s18, 1
      %s26 = ssub.s32 %s18, %s25
      %p27 = scmp.eq.s32.totalorder %s26, 0
      %s29 = sadd.s32 %s28, 1
      %s30 = scalar_select %p27, %s28, %s29
      %p33 = pneg %p27
      %p34 = scmp.eq.s32.totalorder %s18, 1
      %p35 = por %p33, %p34
      %p36 = scmp.ne.s32.totalorder %s28, %s31
      %p37 = scmp.eq.s32.totalorder %s18, 0
      %p38 = por %p36, %p37
      %p39 = scmp.ne.s32.totalorder %s28, %s31
      %p40 = scmp.eq.s32.totalorder %s23, 1
      %p41 = por %p39, %p40
      %p42 = scmp.ne.s32.totalorder %s31, %s32
      %p43 = scmp.eq.s32.totalorder %s23, 0
      %p44 = por %p42, %p43
      %p45 = scmp.ne.s32.totalorder %s31, %s32
      %p46 = scmp.eq.s32.totalorder %s24, 1
      %p47 = por %p45, %p46
      %p49 = scmp.ne.s32.totalorder %s32, %s48
      %p50 = scmp.eq.s32.totalorder %s24, 0
      %p51 = por %p49, %p50
      %s53 = sadd.s32 %s52, 1
      %p56 = scmp.eq.s32.totalorder %s18, 1
      %p57 = scmp.ne.s32.totalorder %s52, %s54
      %p58 = scmp.eq.s32.totalorder %s18, 0
      %p59 = por %p57, %p58
      %p60 = scmp.ne.s32.totalorder %s52, %s54
      %p61 = scmp.eq.s32.totalorder %s23, 1
      %p62 = por %p60, %p61
      %p63 = scmp.ne.s32.totalorder %s54, %s55
      %p64 = scmp.eq.s32.totalorder %s23, 0
      %p65 = por %p63, %p64
      %p66 = scmp.ne.s32.totalorder %s54, %s55
      %p67 = scmp.eq.s32.totalorder %s24, 1
      %p68 = por %p66, %p67
      %p70 = scmp.ne.s32.totalorder %s55, %s69
      %p71 = scmp.eq.s32.totalorder %s24, 0
      %p72 = por %p70, %p71
      %s74 = sadd.s32 %s73, 1
      %p77 = scmp.eq.s32.totalorder %s18, 1
      %p78 = scmp.ne.s32.totalorder %s73, %s75
      %p79 = scmp.eq.s32.totalorder %s18, 0
      %p80 = por %p78, %p79
      %p81 = scmp.ne.s32.totalorder %s73, %s75
      %p82 = scmp.eq.s32.totalorder %s23, 1
      %p83 = por %p81, %p82
      %p84 = scmp.ne.s32.totalorder %s75, %s76
      %p85 = scmp.eq.s32.totalorder %s23, 0
      %p86 = por %p84, %p85
      %p87 = scmp.ne.s32.totalorder %s75, %s76
      %p88 = scmp.eq.s32.totalorder %s24, 1
      %p89 = por %p87, %p88
      %p91 = scmp.ne.s32.totalorder %s76, %s90
      %p92 = scmp.eq.s32.totalorder %s24, 0
      %p93 = por %p91, %p92
      %s95 = sadd.s32 %s94, 1
      %p98 = scmp.eq.s32.totalorder %s18, 1
      %p99 = scmp.ne.s32.totalorder %s94, %s96
      %p100 = scmp.eq.s32.totalorder %s18, 0
      %p101 = por %p99, %p100
      %p102 = scmp.ne.s32.totalorder %s94, %s96
      %p103 = scmp.eq.s32.totalorder %s23, 1
      %p104 = por %p102, %p103
      %p105 = scmp.ne.s32.totalorder %s96, %s97
      %p106 = scmp.eq.s32.totalorder %s23, 0
      %p107 = por %p105, %p106
      %p108 = scmp.ne.s32.totalorder %s96, %s97
      %p109 = scmp.eq.s32.totalorder %s24, 1
      %p110 = por %p108, %p109
      %p112 = scmp.ne.s32.totalorder %s97, %s111
      %p113 = scmp.eq.s32.totalorder %s24, 0
      %p114 = por %p112, %p113
      %s116 = sadd.s32 %s115, 1
      %p119 = scmp.eq.s32.totalorder %s18, 1
      %p120 = scmp.ne.s32.totalorder %s115, %s117
      %p121 = scmp.eq.s32.totalorder %s18, 0
      %p122 = por %p120, %p121
      %p123 = scmp.ne.s32.totalorder %s115, %s117
      %p124 = scmp.eq.s32.totalorder %s23, 1
      %p125 = por %p123, %p124
      %p126 = scmp.ne.s32.totalorder %s117, %s118
      %p127 = scmp.eq.s32.totalorder %s23, 0
      %p128 = por %p126, %p127
      %p129 = scmp.ne.s32.totalorder %s117, %s118
      %p130 = scmp.eq.s32.totalorder %s24, 1
      %p131 = por %p129, %p130
      %p133 = scmp.ne.s32.totalorder %s118, %s132
      %p134 = scmp.eq.s32.totalorder %s24, 0
      %p135 = por %p133, %p134
      %s137 = sadd.s32 %s136, 1
      %p140 = scmp.eq.s32.totalorder %s18, 1
      %p141 = scmp.ne.s32.totalorder %s136, %s138
      %p142 = scmp.eq.s32.totalorder %s18, 0
      %p143 = por %p141, %p142
      %p144 = scmp.ne.s32.totalorder %s136, %s138
      %p145 = scmp.eq.s32.totalorder %s23, 1
      %p146 = por %p144, %p145
      %p147 = scmp.ne.s32.totalorder %s138, %s139
      %p148 = scmp.eq.s32.totalorder %s23, 0
      %p149 = por %p147, %p148
      %p150 = scmp.ne.s32.totalorder %s138, %s139
      %p151 = scmp.eq.s32.totalorder %s24, 1
      %p152 = por %p150, %p151
      %p154 = scmp.ne.s32.totalorder %s139, %s153
      %p155 = scmp.eq.s32.totalorder %s24, 0
      %p156 = por %p154, %p155
      %s158 = sadd.s32 %s157, 1
      %p161 = scmp.eq.s32.totalorder %s18, 1
      %p162 = scmp.ne.s32.totalorder %s157, %s159
      %p163 = scmp.eq.s32.totalorder %s18, 0
      %p164 = por %p162, %p163
      %p165 = scmp.ne.s32.totalorder %s157, %s159
      %p166 = scmp.eq.s32.totalorder %s23, 1
      %p167 = por %p165, %p166
      %p168 = scmp.ne.s32.totalorder %s159, %s160
      %p169 = scmp.eq.s32.totalorder %s23, 0
      %p170 = por %p168, %p169
      %p171 = scmp.ne.s32.totalorder %s159, %s160
      %p172 = scmp.eq.s32.totalorder %s24, 1
      %p173 = por %p171, %p172
      %p175 = scmp.ne.s32.totalorder %s160, %s174
      %p176 = scmp.eq.s32.totalorder %s24, 0
      %p177 = por %p175, %p176
      %s178 = ssub.s32 %s18, %s25
      %p179 = scmp.eq.s32.totalorder %s178, 0
      %s181 = sadd.s32 %s180, 1
      %s182 = scalar_select %p179, %s180, %s181
      %p185 = pneg %p179
      %p186 = scmp.eq.s32.totalorder %s18, 1
      %p187 = por %p185, %p186
      %p188 = scmp.ne.s32.totalorder %s180, %s183
      %p189 = scmp.eq.s32.totalorder %s18, 0
      %p190 = por %p188, %p189
      %p191 = scmp.ne.s32.totalorder %s180, %s183
      %p192 = scmp.eq.s32.totalorder %s23, 1
      %p193 = por %p191, %p192
      %p194 = scmp.ne.s32.totalorder %s183, %s184
      %p195 = scmp.eq.s32.totalorder %s23, 0
      %p196 = por %p194, %p195
      %p197 = scmp.ne.s32.totalorder %s183, %s184
      %p198 = scmp.eq.s32.totalorder %s24, 1
      %p199 = por %p197, %p198
      %p201 = scmp.ne.s32.totalorder %s184, %s200
      %p202 = scmp.eq.s32.totalorder %s24, 0
      %p203 = por %p201, %p202
      %p204 = scmp.le.s32.totalorder 1, %s18
      %p205 = scmp.lt.s32.totalorder %s18, 3
      %p206 = pnand %p204, %p205
      %p207 = pneg %p206
      // Predicated region
      $region9: #{tpu_custom_call.1} parent=5 // pred_check
        _
      $region10: #{tpu_custom_call.1} parent=5 // pred_check_branch
        %209 = sbr.rel (%p206) target = $region12
      $region11: #{tpu_custom_call.1} parent=5 // pred_region
        %s210 = ssub.s32 %s18, 1
        // Predicated region
        $region13: #{tpu_custom_call.1} parent=11 // pred_check
          %p211 = pneg %p65
        $region14: #{tpu_custom_call.1} parent=11 // pred_check_branch
          %213 = sbr.rel (%p211) target = $region16
        $region15: #{tpu_custom_call.1} parent=11 // pred_region
          _
        $region16: #{tpu_custom_call.1} parent=11 // pred_fallthru
          _
        // Predicated region
        $region17: #{tpu_custom_call.1} parent=11 // pred_check
          %p214 = pneg %p86
        $region18: #{tpu_custom_call.1} parent=11 // pred_check_branch
          %216 = sbr.rel (%p214) target = $region20
        $region19: #{tpu_custom_call.1} parent=11 // pred_region
          _
        $region20: #{tpu_custom_call.1} parent=11 // pred_fallthru
          _
        // Predicated region
        $region21: #{tpu_custom_call.1} parent=11 // pred_check
          %p217 = pneg %p107
        $region22: #{tpu_custom_call.1} parent=11 // pred_check_branch
          %219 = sbr.rel (%p217) target = $region24
        $region23: #{tpu_custom_call.1} parent=11 // pred_region
          _
        $region24: #{tpu_custom_call.1} parent=11 // pred_fallthru
          _
        // Predicated region
        $region25: #{tpu_custom_call.1} parent=11 // pred_check
          %p220 = pneg %p128
        $region26: #{tpu_custom_call.1} parent=11 // pred_check_branch
          %222 = sbr.rel (%p220) target = $region28
        $region27: #{tpu_custom_call.1} parent=11 // pred_region
          _
        $region28: #{tpu_custom_call.1} parent=11 // pred_fallthru
          _
        // Predicated region
        $region29: #{tpu_custom_call.1} parent=11 // pred_check
          %p223 = pneg %p149
        $region30: #{tpu_custom_call.1} parent=11 // pred_check_branch
          %225 = sbr.rel (%p223) target = $region32
        $region31: #{tpu_custom_call.1} parent=11 // pred_region
          _
        $region32: #{tpu_custom_call.1} parent=11 // pred_fallthru
          _
        // Predicated region
        $region33: #{tpu_custom_call.1} parent=11 // pred_check
          %p226 = pneg %p170
        $region34: #{tpu_custom_call.1} parent=11 // pred_check_branch
          %228 = sbr.rel (%p226) target = $region36
        $region35: #{tpu_custom_call.1} parent=11 // pred_region
          _
        $region36: #{tpu_custom_call.1} parent=11 // pred_fallthru
          _
      $region12: #{tpu_custom_call.1} parent=5 // pred_fallthru
        _
      %p229 = scmp.lt.s32.totalorder %s18, 2
      // Predicated region
      $region37: #{tpu_custom_call.1} parent=5 // pred_check
        %p230 = pneg %p229
      $region38: #{tpu_custom_call.1} parent=5 // pred_check_branch
        %232 = sbr.rel (%p230) target = $region40
      $region39: #{tpu_custom_call.1} parent=5 // pred_region
        // Predicated region
        $region41: #{tpu_custom_call.1} parent=39 // pred_check
          %p233 = pneg %p38
        $region42: #{tpu_custom_call.1} parent=39 // pred_check_branch
          %235 = sbr.rel (%p233) target = $region44
        $region43: #{tpu_custom_call.1} parent=39 // pred_region
          %s236 = smul.u32 16, %s18
          %p237 = scmp.lt.s32.totalorder %s236, 31
          %s238 = scalar_select %p237, %s236, 31
          %s239 = smul.addr %s238, 8
          %s240 = scalar_lea.vmem %s0, %s239
          %s241 = smul.u32 16, %s18
        $region44: #{tpu_custom_call.1} parent=39 // pred_fallthru
          _
      $region40: #{tpu_custom_call.1} parent=5 // pred_fallthru
        _
      %p242 = scmp.le.s32.totalorder 1, %s18
      %p243 = scmp.lt.s32.totalorder %s18, 3
      %p244 = pnand %p242, %p243
      %p245 = pneg %p244
      // Predicated region
      $region45: #{tpu_custom_call.1} parent=5 // pred_check
        _
      $region46: #{tpu_custom_call.1} parent=5 // pred_check_branch
        %247 = sbr.rel (%p244) target = $region48
      $region47: #{tpu_custom_call.1} parent=5 // pred_region
        %s248 = ssub.s32 %s18, 1
        %s249 = smul.u32 16, %s23
        %p250 = scmp.lt.s32.totalorder %s249, 31
        %s251 = scalar_select %p250, %s249, 31
        %s252 = smul.addr %s251, 8
        %s253 = scalar_lea.vmem %s0, %s252
        %p254 = pneg %p44
        %p255 = pneg %p41
        %p256 = pneg %p65
        %p257 = pneg %p62
        %p258 = pneg %p86
        %p259 = pneg %p83
        %p260 = pneg %p107
        %p261 = pneg %p104
        %p262 = pneg %p128
        %p263 = pneg %p125
        %p264 = pneg %p149
        %p265 = pneg %p146
        %p266 = pneg %p170
        %p267 = pneg %p167
        %p268 = pneg %p196
        %p269 = pneg %p193
        %s270 = sand.u32 %s183, 1
        %s271 = scalar_lea.sflag [#allocation4], %s270
        %s272 = sand.u32 %s183, 1
        %s273 = scalar_lea.vmem [#allocation3], %s272
        %s274 = smul.u32 16, %s23
        %p275 = scmp.lt.s32.totalorder %s274, 31
        %s276 = scalar_select %p275, %s274, 31
        %s277 = smul.addr %s276, 8
        %s278 = scalar_lea.vmem %s0, %s277
        %s279 = smul.u32 16, %s23
        %v281 = vld [vmem:[%s278] sm:$0xff]
        %v282 = vld [vmem:[%s278 + $0x8] sm:$0xff]
        %v283 = vld [vmem:[%s278 + $0x10] sm:$0xff]
        %v284 = vld [vmem:[%s278 + $0x18] sm:$0xff]
        %v285 = vld [vmem:[%s278 + $0x20] sm:$0xff]
        %v286 = vld [vmem:[%s278 + $0x28] sm:$0xff]
        %v287 = vld [vmem:[%s278 + $0x30] sm:$0xff]
        %v288 = vld [vmem:[%s278 + $0x38] sm:$0xff]
        %v289 = vld [vmem:[%s278 + $0x40] sm:$0xff]
        %v290 = vld [vmem:[%s278 + $0x48] sm:$0xff]
        %v291 = vld [vmem:[%s278 + $0x50] sm:$0xff]
        %v292 = vld [vmem:[%s278 + $0x58] sm:$0xff]
        %v293 = vld [vmem:[%s278 + $0x60] sm:$0xff]
        %v294 = vld [vmem:[%s278 + $0x68] sm:$0xff]
        %v295 = vld [vmem:[%s278 + $0x70] sm:$0xff]
        %v296 = vld [vmem:[%s278 + $0x78] sm:$0xff]
        %v297 = vpack.c.bf16 %v282, %v281
        %v298 = vpack.c.bf16 %v284, %v283
        %v299 = vpack.c.bf16 %v286, %v285
        %v300 = vpack.c.bf16 %v288, %v287
        %v301 = vpack.c.bf16 %v290, %v289
        %v302 = vpack.c.bf16 %v292, %v291
        %v303 = vpack.c.bf16 %v294, %v293
        %v304 = vpack.c.bf16 %v296, %v295
        %v305 = vld [vmem:[%s1] sm:$0xf]
        %v306 = vld [vmem:[%s1 + $0x4] sm:$0xf]
        %v307 = vld [vmem:[%s1 + $0x8] sm:$0xf]
        %v308 = vld [vmem:[%s1 + $0xc] sm:$0xf]
        %v309 = vld [vmem:[%s1 + $0x10] sm:$0xf]
        %v310 = vld [vmem:[%s1 + $0x14] sm:$0xf]
        %v311 = vld [vmem:[%s1 + $0x18] sm:$0xf]
        %v312 = vld [vmem:[%s1 + $0x1c] sm:$0xf]
        %v313 = vld [vmem:[%s2] sm:$0xff]
        %v314 = vld [vmem:[%s2 + $0x8] sm:$0xff]
        %v315 = vld [vmem:[%s2 + $0x10] sm:$0xff]
        %v316 = vld [vmem:[%s2 + $0x18] sm:$0xff]
        %v317 = vld [vmem:[%s2 + $0x20] sm:$0xff]
        %v318 = vld [vmem:[%s2 + $0x28] sm:$0xff]
        %v319 = vld [vmem:[%s2 + $0x30] sm:$0xff]
        %v320 = vld [vmem:[%s2 + $0x38] sm:$0xff]
        %322 = vset.pattern.permute.xlu0 0
        %323 = vperm.xlu0 %322, %v313
        %v324 = vpop.permute.xlu0 %323
        %327 = vset.pattern.permute.xlu0 0
        %328 = vperm.xlu0 %327, %v314
        %v329 = vpop.permute.xlu0 %328
        %332 = vset.pattern.permute.xlu0 0
        %333 = vperm.xlu0 %332, %v315
        %v334 = vpop.permute.xlu0 %333
        %337 = vset.pattern.permute.xlu0 0
        %338 = vperm.xlu0 %337, %v316
        %v339 = vpop.permute.xlu0 %338
        %342 = vset.pattern.permute.xlu0 0
        %343 = vperm.xlu0 %342, %v317
        %v344 = vpop.permute.xlu0 %343
        %347 = vset.pattern.permute.xlu0 0
        %348 = vperm.xlu0 %347, %v318
        %v349 = vpop.permute.xlu0 %348
        %352 = vset.pattern.permute.xlu0 0
        %353 = vperm.xlu0 %352, %v319
        %v354 = vpop.permute.xlu0 %353
        %357 = vset.pattern.permute.xlu0 0
        %358 = vperm.xlu0 %357, %v320
        %v359 = vpop.permute.xlu0 %358
        %v369 = vunpack.c.l.b16 %v305
        %v370 = vunpack.c.l.b16 %v306
        %v371 = vunpack.c.l.b16 %v307
        %v372 = vunpack.c.l.b16 %v308
        %v373 = vunpack.c.l.b16 %v309
        %v374 = vunpack.c.l.b16 %v310
        %v375 = vunpack.c.l.b16 %v311
        %v376 = vunpack.c.l.b16 %v312
        %v377 = vpack.c.b16 %v370, %v369
        %v378 = vpack.c.b16 %v372, %v371
        %v379 = vpack.c.b16 %v374, %v373
        %v380 = vpack.c.b16 %v376, %v375
        %vm381 = vcmask 130048
        %v383 = vsel %vm381, %v377, 0
        %v386 = vsel %vm381, %v378, 0
        %v389 = vsel %vm381, %v379, 0
        %v392 = vsel %vm381, %v380, 0
        %v395 = vsel %vm381, %v297, 0
        %v398 = vsel %vm381, %v298, 0
        %v401 = vsel %vm381, %v299, 0
        %v404 = vsel %vm381, %v300, 0
        %v407 = vsel %vm381, %v301, 0
        %v410 = vsel %vm381, %v302, 0
        %v413 = vsel %vm381, %v303, 0
        %v416 = vsel %vm381, %v304, 0
        %418 = vmatpush.bf16.xpose.msra.mxu0 %v416
        %419 = vmatpush.bf16.xpose.msra.mxu0 %v413
        %420 = vmatpush.bf16.xpose.msra.mxu0 %v410
        %421 = vmatpush.bf16.xpose.msra.mxu0 %v407
        %422 = vmatpush.bf16.xpose.msra.mxu0 %v404
        %423 = vmatpush.bf16.xpose.msra.mxu0 %v401
        %424 = vmatpush.bf16.xpose.msra.mxu0 %v398
        %425 = vmatpush.bf16.xpose.msra.mxu0 %v395
        %426 = vmatmul.bf16.gmra.mxu0 %v383
        %v427 = vpop.f32.mrf.mxu0
        %v428 = vadd.f32 %v324, %v427
        %v429 = vpop.f32.mrf.mxu0
        %v430 = vadd.f32 %v329, %v429
        %431 = vmatmul.bf16.gmra.mxu0 %v386
        %v432 = vpop.f32.mrf.mxu0
        %v433 = vadd.f32 %v334, %v432
        %v434 = vpop.f32.mrf.mxu0
        %v435 = vadd.f32 %v339, %v434
        %436 = vmatmul.bf16.gmra.mxu0 %v389
        %v437 = vpop.f32.mrf.mxu0
        %v438 = vadd.f32 %v344, %v437
        %v439 = vpop.f32.mrf.mxu0
        %v440 = vadd.f32 %v349, %v439
        %441 = vmatmul.bf16.gmra.mxu0 %v392
        %v442 = vpop.f32.mrf.mxu0
        %v443 = vadd.f32 %v354, %v442
        %v444 = vpop.f32.mrf.mxu0
        %v445 = vadd.f32 %v359, %v444
        %446 = vdwg.mxu0
        %v447 = vmax.f32 %v428, 0.0
        %v448 = vmax.f32 %v430, 0.0
        %v449 = vmax.f32 %v433, 0.0
        %v450 = vmax.f32 %v435, 0.0
        %v451 = vmax.f32 %v438, 0.0
        %v452 = vmax.f32 %v440, 0.0
        %v453 = vmax.f32 %v443, 0.0
        %v454 = vmax.f32 %v445, 0.0
        %v455 = vld [vmem:[%s3] sm:$0xf]
        %v456 = vld [vmem:[%s3 + $0x4] sm:$0xf]
        %v457 = vld [vmem:[%s3 + $0x8] sm:$0xf]
        %v458 = vld [vmem:[%s3 + $0xc] sm:$0xf]
        %v459 = vpack.c.bf16 %v448, %v447
        %v460 = vpack.c.bf16 %v450, %v449
        %v461 = vpack.c.bf16 %v452, %v451
        %v462 = vpack.c.bf16 %v454, %v453
        %v463 = vld [vmem:[%s4] sm:$0xff]
        %v464 = vld [vmem:[%s4 + $0x8] sm:$0xff]
        %v465 = vld [vmem:[%s4 + $0x10] sm:$0xff]
        %v466 = vld [vmem:[%s4 + $0x18] sm:$0xff]
        %468 = vset.pattern.permute.xlu0 0
        %469 = vperm.xlu0 %468, %v463
        %v470 = vpop.permute.xlu0 %469
        %473 = vset.pattern.permute.xlu0 0
        %474 = vperm.xlu0 %473, %v464
        %v475 = vpop.permute.xlu0 %474
        %478 = vset.pattern.permute.xlu0 0
        %479 = vperm.xlu0 %478, %v465
        %v480 = vpop.permute.xlu0 %479
        %483 = vset.pattern.permute.xlu0 0
        %484 = vperm.xlu0 %483, %v466
        %v485 = vpop.permute.xlu0 %484
        %v491 = vunpack.c.l.b16 %v455
        %v492 = vunpack.c.l.b16 %v456
        %v493 = vunpack.c.l.b16 %v457
        %v494 = vunpack.c.l.b16 %v458
        %v495 = vpack.c.b16 %v492, %v491
        %v496 = vpack.c.b16 %v494, %v493
        %vm497 = vcmask 523264
        %v499 = vsel %vm497, %v495, 0
        %v502 = vsel %vm497, %v496, 0
        %504 = vmatpush.bf16.msra.mxu0 0
        %505 = vmatpush.bf16.msra.mxu0 0
        %506 = vmatpush.bf16.msra.mxu0 0
        %507 = vmatpush.bf16.msra.mxu0 0
        %508 = vmatpush.bf16.msra.mxu0 %v462
        %509 = vmatpush.bf16.msra.mxu0 %v461
        %510 = vmatpush.bf16.msra.mxu0 %v460
        %511 = vmatpush.bf16.msra.mxu0 %v459
        %512 = vmatmul.bf16.gmra.mxu0 %v499
        %v513 = vpop.f32.mrf.mxu0
        %v514 = vadd.f32 %v470, %v513
        %v515 = vpop.f32.mrf.mxu0
        %v516 = vadd.f32 %v475, %v515
        %517 = vmatmul.bf16.gmra.mxu0 %v502
        %v518 = vpop.f32.mrf.mxu0
        %v519 = vadd.f32 %v480, %v518
        %v520 = vpop.f32.mrf.mxu0
        %v521 = vadd.f32 %v485, %v520
        %522 = vdwg.mxu0
        %v523 = vmax.f32 %v514, 0.0
        %v524 = vmax.f32 %v516, 0.0
        %v525 = vmax.f32 %v519, 0.0
        %v526 = vmax.f32 %v521, 0.0
        %v527 = vld [vmem:[%s5] sm:$0xff]
        %v528 = vld [vmem:[%s5 + $0x8] sm:$0xff]
        %v529 = vld [vmem:[%s5 + $0x10] sm:$0xff]
        %v530 = vld [vmem:[%s5 + $0x18] sm:$0xff]
        %532 = vset.pattern.permute.xlu0 0
        %533 = vperm.xlu0 %532, %v527
        %v534 = vpop.permute.xlu0 %533
        %537 = vset.pattern.permute.xlu0 0
        %538 = vperm.xlu0 %537, %v528
        %v539 = vpop.permute.xlu0 %538
        %542 = vset.pattern.permute.xlu0 0
        %543 = vperm.xlu0 %542, %v529
        %v544 = vpop.permute.xlu0 %543
        %547 = vset.pattern.permute.xlu0 0
        %548 = vperm.xlu0 %547, %v530
        %v549 = vpop.permute.xlu0 %548
        %v551 = vmul.f32 %v523, %v534
        %v552 = vmul.f32 %v524, %v539
        %v553 = vmul.f32 %v525, %v544
        %v554 = vmul.f32 %v526, %v549
        %v555 = vadd.f32 %v551, %v552
        %v556 = vadd.f32 %v555, %v553
        %v557 = vadd.f32 %v556, %v554
        %v558 = vrot.slane %v557, 4
        %v559 = vadd.f32 %v557, %v558
        %v560 = vrot.slane %v559, 2
        %v561 = vadd.f32 %v559, %v560
        %v562 = vrot.slane %v561, 1
        %v563 = vadd.f32 %v561, %v562
        %v564 = vld [vmem:[#allocation2] sm:$0x1]
        %566 = vset.pattern.permute.xlu0 0
        %567 = vperm.xlu0 %566, %v564
        %v568 = vpop.permute.xlu0 %567
        %v570 = vperm.slane %v568, 0
        %v571 = vadd.f32 %v563, %v570
        %v572 = vsub.f32 0.0, %v571
        %v573 = vmul.f32 %v572, 1.442695
        %v574 = vpow.pop %v573
        %v575 = vadd.f32 %v574, 1.0
        %v576 = vrcp.pop %v575
        %577 = vst [vmem:[%s273] sm:$0x1] %v576
        %s578 = sand.u32 %s183, 1
        %s579 = scalar_lea.sflag [#allocation4], %s578
        %s580 = sand.u32 %s183, 1
        %s581 = scalar_lea.vmem [#allocation3], %s580
        // Predicated region
        $region49: #{tpu_custom_call.1} parent=47 // pred_check
          %p582 = pneg %p193
        $region50: #{tpu_custom_call.1} parent=47 // pred_check_branch
          %584 = sbr.rel (%p582) target = $region52
        $region51: #{tpu_custom_call.1} parent=47 // pred_region
          %586 = vsyncadd %s579, 0
          %s587 = scalar_lea.hbm %s7, %s23
          %s589 = sshll.u32 %s581, 4
          %s590 = int_to_ptr.vmem [resolvable:$true] %s589
          %s591 = sshll.u32 %s587, 4
          %s592 = int_to_ptr.hbm [resolvable:$true] %s591
          %594 = dma.vmem_to_hbm [thread:$0]  %s590, 16, %s592, %s579
        $region52: #{tpu_custom_call.1} parent=47 // pred_fallthru
          _
      $region48: #{tpu_custom_call.1} parent=5 // pred_fallthru
        _
      %p595 = scmp.le.s32.totalorder 2, %s18
      // Predicated region
      $region53: #{tpu_custom_call.1} parent=5 // pred_check
        %p596 = pneg %p595
      $region54: #{tpu_custom_call.1} parent=5 // pred_check_branch
        %598 = sbr.rel (%p596) target = $region56
      $region55: #{tpu_custom_call.1} parent=5 // pred_region
        %s599 = ssub.s32 %s18, 2
        // Predicated region
        $region57: #{tpu_custom_call.1} parent=55 // pred_check
          %p600 = pneg %p199
        $region58: #{tpu_custom_call.1} parent=55 // pred_check_branch
          %602 = sbr.rel (%p600) target = $region60
        $region59: #{tpu_custom_call.1} parent=55 // pred_region
          %s603 = sand.u32 %s184, 1
          %s604 = scalar_lea.sflag [#allocation4], %s603
          %s605 = sand.u32 %s184, 1
          %s606 = scalar_lea.vmem [#allocation3], %s605
          %608 = dma.done %s604, 16
        $region60: #{tpu_custom_call.1} parent=55 // pred_fallthru
          _
      $region56: #{tpu_custom_call.1} parent=5 // pred_fallthru
        _
    $region6: #{tpu_custom_call.1} parent=1 // loop_footer
      %s22 = sadd.s32 1, %s18
    $region7: #{tpu_custom_call.1} parent=1 // loop_footer_branch
      %17 = sbr.rel target = $region3
    $region8: #{tpu_custom_call.1} parent=1 // loop_exit
      _
    %609 = vsyncpa [#allocation4], 1
    %s610 = scalar_lea.sflag [#allocation4], 1
    %611 = vsyncpa %s610, 1

</llo_original>
